<compile_context>
chip_gen: v7x
topology: tpu7x:2x2x1
jax: 0.10.0
libtpu: 0.0.40
codegen_flags: <defaults>
</compile_context>

<pallas_src>
from functools import partial

import jax
import jax.numpy as jnp
from jax.experimental import pallas as pl
from jax.experimental.pallas import tpu as pltpu

_BN_EPS = 1e-5
_TARGET_TILE_ROWS = 2048              # ~1K-4K rows/step is near the HBM roofline
_VMEM_FALLBACK_CAP = 64 * 1024 * 1024  # assume smallest (v7x) VMEM if query fails


# ---------------------------------------------------------------------------
# One-time probes / hardware queries (run once, outside jit).
# ---------------------------------------------------------------------------
_ROLL_MATCHES_JNP = None
_VMEM_BUDGET = None


def _roll_probe_kernel(x_ref, o_ref):
    o_ref[...] = pltpu.roll(x_ref[...], 1, 0)


def _roll_matches_jnp() -> bool:
    """True iff pltpu.roll(x, +1, axis=0)[i] == x[i-1] (jnp.roll convention)."""
    global _ROLL_MATCHES_JNP
    if _ROLL_MATCHES_JNP is None:
        x = jnp.arange(8 * 128, dtype=jnp.float32).reshape(8, 128)
        y = pl.pallas_call(
            _roll_probe_kernel,
            out_shape=jax.ShapeDtypeStruct((8, 128), jnp.float32),
            in_specs=[pl.BlockSpec(memory_space=pltpu.MemorySpace.VMEM)],
            out_specs=pl.BlockSpec(memory_space=pltpu.MemorySpace.VMEM),
        )(x)
        _ROLL_MATCHES_JNP = bool(y[1, 0] == x[0, 0])
    return _ROLL_MATCHES_JNP


def _vmem_budget() -> int:
    """Scoped-VMEM budget: ~3/4 of physical VMEM, capped at 96 MiB.

    v5e/v6e (128 MiB physical) -> 96 MiB; v7x (64 MiB physical) -> 48 MiB.
    Falls back to a v7x-safe 48 MiB if the hardware query is unavailable.
    """
    global _VMEM_BUDGET
    if _VMEM_BUDGET is None:
        try:
            cap = int(pltpu.get_tpu_info().vmem_capacity_bytes)
        except Exception:
            cap = _VMEM_FALLBACK_CAP
        _VMEM_BUDGET = int(min((cap * 3) // 4, 96 * 1024 * 1024))
    return _VMEM_BUDGET


def _pick_tile_n(n, l, cin, cout, out_bytes, vmem_budget):
    """Largest batch tile whose per-step footprint fits ~half the VMEM budget,
    targeting ~_TARGET_TILE_ROWS (tile_n*L) rows per grid step, and keeping
    grid >= 2 when possible so v7x's two TensorCores both get work."""
    per_sample = l * (
        2 * (2 * cin + 2 * cout + out_bytes * cout)  # double-buffered x/h/out tiles
        + 2 * (3 * cout + cin)                       # bf16 im2col operand
        + 3 * 4 * cout                               # f32 intermediates (h, hn, y)
    )
    cap = max(1, min((vmem_budget // 2) // max(per_sample, 1),
                     max(1, _TARGET_TILE_ROWS // max(l, 1)),
                     n))
    divisors = [t for t in range(1, n + 1) if n % t == 0]
    tile = max(t for t in divisors if t <= cap)
    if tile == n and n > 1:  # keep at least 2 grid steps (v7x: 2 TCs per chip)
        tile = max(t for t in divisors if t <= n // 2)
    return tile


# ---------------------------------------------------------------------------
# In-kernel helpers
# ---------------------------------------------------------------------------
def _conv_taps_bf16(a_f32, L, roll_jnp_style):
    """(previous, current, next) frame rows of a (tile_n*L, C) activation, bf16.

    Boundary rows are zeroed per sample (== Conv1d zero padding).  Shifts use
    the XLU rotate (pltpu.roll) on the f32 activation, and each tap is dropped
    to bf16 *before* the im2col concatenation so the big (nl, K) MXU operand is
    materialized at half width.
    """
    nl, c = a_f32.shape
    frame = jax.lax.broadcasted_iota(jnp.int32, (nl // L, L, c), 1).reshape(nl, c)
    s_prev, s_next = (1, nl - 1) if roll_jnp_style else (nl - 1, 1)
    prev = jnp.where(frame == 0, 0.0, pltpu.roll(a_f32, s_prev, 0))
    nxt = jnp.where(frame == L - 1, 0.0, pltpu.roll(a_f32, s_next, 0))
    bf = jnp.bfloat16
    return prev.astype(bf), a_f32.astype(bf), nxt.astype(bf)


def _conv1_silu_stats_kernel(x_ref, w1_ref, b1_ref, h_ref, stats_ref,
                             *, roll_jnp_style):
    tile_n, L, cin = x_ref.shape
    nl = tile_n * L
    x2 = x_ref[...].astype(jnp.float32).reshape(nl, cin)   # bf16 tile from HBM

    # im2col: one MXU matmul with K = 3*Cin, bf16 operands, f32 accumulation.
    lhs = jnp.concatenate(_conv_taps_bf16(x2, L, roll_jnp_style), axis=-1)
    h = jnp.dot(lhs, w1_ref[...], preferred_element_type=jnp.float32) + b1_ref[...]

    # SiLU (f32; exp runs on the EUP slot)
    h = h * jax.nn.sigmoid(h)

    # per-tile partial BatchNorm statistics, merged into ONE (1,2,Cout) store.
    hsum = jnp.sum(h, axis=0, keepdims=True)
    hsq = jnp.sum(h * h, axis=0, keepdims=True)
    stats_ref[...] = jnp.concatenate([hsum, hsq], axis=0).reshape(1, 2, -1)

    # carry the activation in bf16 between passes (MXU consumes bf16 anyway)
    h_ref[...] = h.reshape(tile_n, L, -1).astype(h_ref.dtype)


def _bn_conv2_skip_kernel(x_ref, h_ref, scale_ref, shift_ref, w2p_ref, b2p_ref,
                          o_ref, *, roll_jnp_style):
    tile_n, L, cin = x_ref.shape
    cout = h_ref.shape[-1]
    nl = tile_n * L

    x2 = x_ref[...].reshape(nl, cin)                        # bf16, MXU operand as-is
    h = h_ref[...].astype(jnp.float32).reshape(nl, cout)
    hn = h * scale_ref[...] + shift_ref[...]                # BatchNorm -> affine (f32)

    # fused im2col for conv2 + 1x1 skip: ONE matmul with K = 3*Cout + Cin.
    lhs = jnp.concatenate(_conv_taps_bf16(hn, L, roll_jnp_style) + (x2,), axis=-1)
    y = jnp.dot(lhs, w2p_ref[...], preferred_element_type=jnp.float32) + b2p_ref[...]

    o_ref[...] = y.reshape(tile_n, L, cout).astype(o_ref.dtype)


# ---------------------------------------------------------------------------
# Forward wrapper
# ---------------------------------------------------------------------------
def residual_forward(x_nlc, params, tile_n=None, out_dtype=jnp.float32):
    """Residual forward on channels-last input (N, L, Cin) -> (N, L, Cout).

    out_dtype=jnp.bfloat16 halves the final HBM write if the consumer tolerates
    it; the default f32 matches the PyTorch module.
    """
    n, l, cin = x_nlc.shape
    cout = params["w1"].shape[-1]
    out_dtype = jnp.dtype(out_dtype)
    budget = _vmem_budget()
    if tile_n is None:
        tile_n = _pick_tile_n(n, l, cin, cout, out_dtype.itemsize, budget)
    return _residual_forward(x_nlc, params, tile_n, _roll_matches_jnp(),
                             budget, out_dtype)


@partial(jax.jit, static_argnums=(2, 3, 4, 5))
def _residual_forward(x_nlc, params, tile_n, roll_jnp_style, vmem_budget,
                      out_dtype):
    n, l, cin = x_nlc.shape
    cout = params["w1"].shape[-1]
    assert n % tile_n == 0, "tile_n must divide the batch"
    grid = (n // tile_n,)

    # x only ever feeds the MXU as bf16 (twice: pass A and pass B) -> cast once.
    # When this module is jit-fused into a larger network this convert folds
    # into x's producer; standalone it is one small copy pass.
    x_bf = x_nlc.astype(jnp.bfloat16)

    # Weight re-layout (tiny, once per compile): conv1 taps -> (3*Cin, Cout);
    # conv2 taps + 1x1 skip stacked -> (3*Cout + Cin, Cout); fused bias b2+bp.
    # Weights pre-cast to bf16 (MXU-native); biases / BN params stay f32.
    w1 = params["w1"].reshape(3 * cin, cout).astype(jnp.bfloat16)
    b1 = params["b1"].astype(jnp.float32)
    w2p = jnp.concatenate(
        [params["w2"].reshape(3 * cout, cout), params["wp"]], axis=0
    ).astype(jnp.bfloat16)
    b2p = (params["b2"] + params["bp"]).astype(jnp.float32)

    cparams = pltpu.CompilerParams(
        dimension_semantics=("parallel",),   # batch tiles are independent
        vmem_limit_bytes=vmem_budget,
    )

    # ---- pass A: conv1 + SiLU + merged per-tile BN partial sums -------------
    h, stats = pl.pallas_call(
        partial(_conv1_silu_stats_kernel, roll_jnp_style=roll_jnp_style),
        grid=grid,
        in_specs=[
            pl.BlockSpec((tile_n, l, cin), lambda i: (i, 0, 0)),
            pl.BlockSpec((3 * cin, cout), lambda i: (0, 0)),
            pl.BlockSpec((1, cout), lambda i: (0, 0)),
        ],
        out_specs=(
            pl.BlockSpec((tile_n, l, cout), lambda i: (i, 0, 0)),
            pl.BlockSpec((1, 2, cout), lambda i: (i, 0, 0)),
        ),
        out_shape=(
            jax.ShapeDtypeStruct((n, l, cout), jnp.bfloat16),
            jax.ShapeDtypeStruct((grid[0], 2, cout), jnp.float32),
        ),
        compiler_params=cparams,
    )(x_bf, w1, b1)

    # ---- global BatchNorm statistics (tiny per-channel XLA glue, f32) -------
    # TODO(synk): E[h^2]-E[h]^2 can cancel for |mean| >> std; post-SiLU means
    # are modest, but a shifted/two-level accumulation would be more robust.
    sums = jnp.sum(stats, axis=0)                          # (2, Cout)
    mean = sums[0:1] / (n * l)                             # (1, Cout)
    var = sums[1:2] / (n * l) - mean * mean                # biased variance
    scale = params["gamma"] * jax.lax.rsqrt(var + _BN_EPS)  # fold BN -> affine
    shift = params["beta"] - mean * scale

    # ---- pass B: normalize + fused conv2 + 1x1 skip --------------------------
    out = pl.pallas_call(
        partial(_bn_conv2_skip_kernel, roll_jnp_style=roll_jnp_style),
        grid=grid,
        in_specs=[
            pl.BlockSpec((tile_n, l, cin), lambda i: (i, 0, 0)),
            pl.BlockSpec((tile_n, l, cout), lambda i: (i, 0, 0)),
            pl.BlockSpec((1, cout), lambda i: (0, 0)),
            pl.BlockSpec((1, cout), lambda i: (0, 0)),
            pl.BlockSpec((3 * cout + cin, cout), lambda i: (0, 0)),
            pl.BlockSpec((1, cout), lambda i: (0, 0)),
        ],
        out_specs=pl.BlockSpec((tile_n, l, cout), lambda i: (i, 0, 0)),
        out_shape=jax.ShapeDtypeStruct((n, l, cout), out_dtype),
        compiler_params=cparams,
    )(x_bf, h, scale, shift, w2p, b2p)
    return out


# ---------------------------------------------------------------------------
# Parameters + references
# ---------------------------------------------------------------------------
def make_params(key, dim_in, dim_out):
    """Deterministic init mimicking PyTorch Conv1d default uniform(+-1/sqrt(fan_in*k))."""
    k1, k2, k3, k4, k5, k6 = jax.random.split(key, 6)
    lim1 = 1.0 / (dim_in * 3) ** 0.5
    lim2 = 1.0 / (dim_out * 3) ** 0.5
    limp = 1.0 / dim_in ** 0.5
    if dim_in == dim_out:
        # nn.Identity() skip == 1x1 conv with identity weight and zero bias.
        wp = jnp.eye(dim_in, dtype=jnp.float32)
        bp = jnp.zeros((1, dim_out), jnp.float32)
    else:
        wp = jax.random.uniform(k5, (dim_in, dim_out), jnp.float32, -limp, limp)
        bp = jax.random.uniform(k6, (1, dim_out), jnp.float32, -limp, limp)
    return {
        "w1": jax.random.uniform(k1, (3, dim_in, dim_out), jnp.float32, -lim1, lim1),
        "b1": jax.random.uniform(k2, (1, dim_out), jnp.float32, -lim1, lim1),
        "gamma": jnp.ones((1, dim_out), jnp.float32),
        "beta": jnp.zeros((1, dim_out), jnp.float32),
        "w2": jax.random.uniform(k3, (3, dim_out, dim_out), jnp.float32, -lim2, lim2),
        "b2": jax.random.uniform(k4, (1, dim_out), jnp.float32, -lim2, lim2),
        "wp": wp,
        "bp": bp,
    }


def residual_reference_f32(x_nlc, p):
    """Plain-JAX full-f32 reference with the PyTorch module's math (training-mode BN)."""
    def conv(x, w, b):
        L = x.shape[1]
        xpad = jnp.pad(x, ((0, 0), (1, 1), (0, 0)))
        return sum(jnp.einsum("nlc,cd->nld", xpad[:, k:k + L, :], w[k])
                   for k in range(3)) + b[None]
    h = conv(x_nlc, p["w1"], p["b1"])
    h = h * jax.nn.sigmoid(h)
    mean = jnp.mean(h, axis=(0, 1), keepdims=True)
    var = jnp.mean((h - mean) ** 2, axis=(0, 1), keepdims=True)
    h = (h - mean) / jnp.sqrt(var + _BN_EPS) * p["gamma"][None] + p["beta"][None]
    h = conv(h, p["w2"], p["b2"])
    proj = jnp.einsum("nlc,cd->nld", x_nlc, p["wp"]) + p["bp"][None]
    return h + proj


def residual_reference_mirror(x_nlc, p):
    """Reference mirroring the kernel numerics (bf16 MXU operands, bf16 carried
    activation, f32 accumulation and f32 BatchNorm statistics)."""
    n, l, cin = x_nlc.shape
    cout = p["w1"].shape[-1]

    def mm(a, w):
        return jnp.dot(a.astype(jnp.bfloat16), w.astype(jnp.bfloat16),
                       preferred_element_type=jnp.float32)

    def taps(a):  # zero-padded previous / current / next frame
        ap = jnp.pad(a, ((0, 0), (1, 1), (0, 0)))
        return ap[:, :l, :], a, ap[:, 2:, :]

    lhs1 = jnp.concatenate(taps(x_nlc), axis=-1).reshape(n * l, 3 * cin)
    h = mm(lhs1, p["w1"].reshape(3 * cin, cout)) + p["b1"]
    h = h * jax.nn.sigmoid(h)
    mean = jnp.sum(h, axis=0, keepdims=True) / (n * l)
    var = jnp.sum(h * h, axis=0, keepdims=True) / (n * l) - mean * mean
    scale = p["gamma"] * jax.lax.rsqrt(var + _BN_EPS)
    shift = p["beta"] - mean * scale
    hn = h.astype(jnp.bfloat16).astype(jnp.float32) * scale + shift
    lhs2 = jnp.concatenate(list(taps(hn.reshape(n, l, cout))) + [x_nlc],
                           axis=-1).reshape(n * l, 3 * cout + cin)
    w2p = jnp.concatenate([p["w2"].reshape(3 * cout, cout), p["wp"]], axis=0)
    y = mm(lhs2, w2p) + (p["b2"] + p["bp"])
    return y.reshape(n, l, cout)


if __name__ == "__main__":
    N, C_IN, C_OUT, L = 4, 8, 16, 16  # small demo shapes; real module uses C=57
    key = jax.random.PRNGKey(0)
    kx, kp = jax.random.split(key)

    # PyTorch-convention input (N, C, L) -> channels-last kernel layout (N, L, C)
    x_ncl = jax.random.normal(kx, (N, C_IN, L), jnp.float32)
    x_nlc = jnp.transpose(x_ncl, (0, 2, 1))

    params = make_params(kp, C_IN, C_OUT)

    out = residual_forward(x_nlc, params)
    out = jax.block_until_ready(out)
    assert out.shape == (N, L, C_OUT)
    assert out.dtype == jnp.float32

    # strict check vs a reference mirroring the kernel's bf16/f32 numerics
    ref_mirror = residual_reference_mirror(x_nlc, params)
    assert jnp.allclose(out, ref_mirror, atol=5e-3, rtol=5e-3), \
        "mismatch vs mirrored (bf16-matmul) reference"

    # semantic check vs the full-f32 PyTorch-math reference (bf16 MXU operands
    # introduce ~1e-2-scale differences)
    ref_f32 = residual_reference_f32(x_nlc, params)
    assert jnp.allclose(out, ref_f32, atol=1e-1, rtol=1e-1), \
        "mismatch vs f32 reference"

    print("KERNEL_OK")
</pallas_src>

<mosaic_0001>
module attributes {stable_mosaic.version = 11 : i64} {
  func.func @_roll_probe_kernel(%arg0: memref<8x128xf32, #tpu.memory_space<vmem>>, %arg1: memref<8x128xf32, #tpu.memory_space<vmem>>) attributes {dimension_semantics = [], scalar_prefetch = 0 : i64, scratch_operands = 0 : i64, tpu.core_type = #tpu.core_type<tc>} {
    %c0 = arith.constant 0 : index
    %c0_0 = arith.constant 0 : index
    %0 = vector.load %arg0[%c0, %c0_0] : memref<8x128xf32, #tpu.memory_space<vmem>>, vector<8x128xf32>
    %c1_i32 = arith.constant 1 : i32
    %1 = tpu.dynamic_rotate %0 by %c1_i32 dim 0 : vector<8x128xf32>, i32 -> vector<8x128xf32>
    %c0_1 = arith.constant 0 : index
    %c0_2 = arith.constant 0 : index
    %2 = vector.load %arg1[%c0_1, %c0_2] : memref<8x128xf32, #tpu.memory_space<vmem>>, vector<8x128xf32>
    tpu.vector_store %arg1[%c0_1, %c0_2], %1 {strides = array<i32>} : memref<8x128xf32, #tpu.memory_space<vmem>>, vector<8x128xf32>,
    return
  }
}

</mosaic_0001>

<llo_original>
// kernel: tpu_custom_call.1
$region0: #{tpu_custom_call.1}
  #allocation0 [shape = 'u32[]', space=smem, size = 0x4, offset = 0x4, fixed_abs, tag = 'smem constant byte address 0x4 - core index']
  #allocation1 [shape = 'u32[144,128]{1,0:T(1,128)}', space=vmem, size = 0x12000, scoped, tag = 'internal scratch']
  %s0 = inlined_call_operand.hbm [shape: f32[8,128], index: 0, kind: input, shape index: {}]
  %s1 = inlined_call_operand.hbm [shape: f32[8,128], index: 1, kind: output, shape index: {}]
  %s2 = sld [smem:[#allocation0]]
  $region18: #{tpu_custom_call.1} parent=0
    _
  %s4 = ssub.s32 1, %s2
  %s5 = scalar_select 0, %s4, %s2
  $region1: #{tpu_custom_call.1} parent=0
    #allocation2 [shape = 'u8[4096]{0}', space=vmem, size = 0x1000, scoped, tag = 'input window, operand 0, single buffered']
    #allocation3 [shape = 's32[1]{0}', space=sflag, size = 0x4, scoped, tag = 'scoped memory for tpu_custom_call.1']
    #allocation4 [shape = 's32[1]{0}', space=sflag, size = 0x4, scoped, tag = 'scoped memory for tpu_custom_call.1']
    #allocation5 [shape = 'u8[4096]{0}', space=vmem, size = 0x1000, scoped, tag = 'output window, operand 0, single buffered']
    %6 = vsyncpa [#allocation3], 0
    %7 = vsyncpa [#allocation4], 0
    // Predicated region
    $region2: #{tpu_custom_call.1} parent=1 // pred_check
      _
    $region3: #{tpu_custom_call.1} parent=1 // pred_check_branch
      %9 = sbr.rel (0) target = $region5
    $region4: #{tpu_custom_call.1} parent=1 // pred_region
      %s11 = ssub.s32 128, 128
      %12 = vsyncadd [#allocation3], %s11
      %s14 = sshll.u32 [#allocation2], 4
      %s15 = int_to_ptr.vmem [resolvable:$true] %s14
      %17 = dma.hbm_to_vmem [thread:$0]  %s0, 128, %s15, [#allocation3]
    $region5: #{tpu_custom_call.1} parent=1 // pred_fallthru
      _
    // Predicated region
    $region6: #{tpu_custom_call.1} parent=1 // pred_check
      _
    $region7: #{tpu_custom_call.1} parent=1 // pred_check_branch
      %19 = sbr.rel (0) target = $region9
    $region8: #{tpu_custom_call.1} parent=1 // pred_region
      %20 = dma.done [#allocation3], 128
    $region9: #{tpu_custom_call.1} parent=1 // pred_fallthru
      _
    %v21 = vld [vmem:[#allocation2] sm:$0xff]
    %v22 = vrot.slane %v21, 7
    %23 = vst [vmem:[#allocation5] sm:$0xff] %v22
    // Predicated region
    $region10: #{tpu_custom_call.1} parent=1 // pred_check
      _
    $region11: #{tpu_custom_call.1} parent=1 // pred_check_branch
      %25 = sbr.rel (0) target = $region13
    $region12: #{tpu_custom_call.1} parent=1 // pred_region
      %s27 = ssub.s32 128, 128
      %28 = vsyncadd [#allocation4], %s27
      %s30 = sshll.u32 [#allocation5], 4
      %s31 = int_to_ptr.vmem [resolvable:$true] %s30
      %33 = dma.vmem_to_hbm [thread:$0]  %s31, 128, %s1, [#allocation4]
    $region13: #{tpu_custom_call.1} parent=1 // pred_fallthru
      _
    // Predicated region
    $region14: #{tpu_custom_call.1} parent=1 // pred_check
      _
    $region15: #{tpu_custom_call.1} parent=1 // pred_check_branch
      %35 = sbr.rel (0) target = $region17
    $region16: #{tpu_custom_call.1} parent=1 // pred_region
      %36 = dma.done [#allocation4], 128
    $region17: #{tpu_custom_call.1} parent=1 // pred_fallthru
      _
    %37 = vsyncpa [#allocation3], 1
    %38 = vsyncpa [#allocation4], 1

</llo_original>
